<compile_context>
chip_gen: v5e
topology: v5e:2x2
jax: 0.10.0
libtpu: 0.0.40
codegen_flags: <defaults>
</compile_context>

<pallas_src>
import functools

import jax
import jax.numpy as jnp
from jax import lax
from jax.experimental import pallas as pl
from jax.experimental.pallas import tpu as pltpu


def _round_up(x, m):
    return ((x + m - 1) // m) * m


# ---------------------------- tiled linear kernel ----------------------------
# Optionally fuses: LayerNorm on the input row, bias add, GELU, residual add.
# Accumulates in an f32 VMEM scratch over the K grid axis (pattern P1 + P3).

def _make_linear_kernel(*, act, has_bias, has_res, has_ln, trans_b, nk,
                        ln_eps=1e-5):
    def kernel(*refs):
        it = iter(refs)
        x_ref = next(it)
        g_ref = next(it) if has_ln else None
        be_ref = next(it) if has_ln else None
        w_ref = next(it)
        b_ref = next(it) if has_bias else None
        r_ref = next(it) if has_res else None
        o_ref = next(it)
        acc_ref = next(it)

        @pl.when(pl.program_id(2) == 0)
        def _():
            acc_ref[...] = jnp.zeros_like(acc_ref)

        x = x_ref[...]
        if has_ln:
            xf = x.astype(jnp.float32)
            mu = jnp.mean(xf, axis=-1, keepdims=True)
            var = jnp.mean(jnp.square(xf - mu), axis=-1, keepdims=True)
            xf = (xf - mu) * lax.rsqrt(var + ln_eps)
            x = (xf * g_ref[...] + be_ref[...]).astype(w_ref.dtype)
        elif x.dtype != w_ref.dtype:
            x = x.astype(w_ref.dtype)

        w = w_ref[...]
        if trans_b:
            acc_ref[...] += lax.dot_general(
                x, w, (((1,), (1,)), ((), ())),
                preferred_element_type=jnp.float32)
        else:
            acc_ref[...] += jnp.dot(x, w, preferred_element_type=jnp.float32)

        @pl.when(pl.program_id(2) == nk - 1)
        def _():
            y = acc_ref[...]
            if has_bias:
                y = y + b_ref[...].astype(jnp.float32)
            if act == "gelu":
                y = jax.nn.gelu(y, approximate=False)   # matches torch F.gelu
            if has_res:
                y = y + r_ref[...].astype(jnp.float32)
            o_ref[...] = y.astype(o_ref.dtype)

    return kernel


def pallas_linear(x, w, b=None, *, gamma=None, beta=None, residual=None,
                  act=None, trans_b=False, out_dtype=jnp.float32,
                  tm=256, tn=256, tk=1024):
    """y = [LN(x)] @ W (+ b) [gelu] (+ residual).

    W stored (K, N) (PyTorch Linear weight.T), or (N, K) when trans_b=True
    (e.g. the tied embedding for the vocab projection - no transposed copy).
    Weights are expected in bf16; accumulation is f32.
    """
    M, K = x.shape
    if trans_b:
        N, Kw = w.shape
    else:
        Kw, N = w.shape
    assert K == Kw
    has_ln = gamma is not None
    has_bias = b is not None
    has_res = residual is not None

    # ---- effective tiles (obey the (8,128) rules; clamp to full dims) ----
    tm_e = tm if M > tm else _round_up(M, 8)
    M_pad = _round_up(M, tm_e)

    if N <= tn:
        tn_e, N_pad = N, N                 # full-dim block
    else:
        tn_e, N_pad = tn, _round_up(N, tn) # tn is a multiple of 128

    if has_ln or K <= tk:
        tk_e, K_pad = K, K                 # LN needs the whole row
    else:
        tk_e, K_pad = tk, _round_up(K, tk)

    # ---- pad ragged operands (no-op at aligned sizes) ----
    if M_pad != M:
        x = jnp.pad(x, ((0, M_pad - M), (0, 0)))
        if has_res:
            residual = jnp.pad(residual, ((0, M_pad - M), (0, 0)))
    if K_pad != K:
        x = jnp.pad(x, ((0, 0), (0, K_pad - K)))
        w = (jnp.pad(w, ((0, 0), (0, K_pad - K))) if trans_b
             else jnp.pad(w, ((0, K_pad - K), (0, 0))))
    if N_pad != N:
        w = (jnp.pad(w, ((0, N_pad - N), (0, 0))) if trans_b
             else jnp.pad(w, ((0, 0), (0, N_pad - N))))
        if has_bias:
            b = jnp.pad(b, (0, N_pad - N))
        if has_res:
            residual = jnp.pad(residual, ((0, 0), (0, N_pad - N)))

    nk = K_pad // tk_e
    kernel = _make_linear_kernel(act=act, has_bias=has_bias, has_res=has_res,
                                 has_ln=has_ln, trans_b=trans_b, nk=nk)

    in_specs = [pl.BlockSpec((tm_e, tk_e), lambda i, j, k: (i, k))]
    operands = [x]
    if has_ln:
        in_specs += [pl.BlockSpec((1, K_pad), lambda i, j, k: (0, 0)),
                     pl.BlockSpec((1, K_pad), lambda i, j, k: (0, 0))]
        operands += [gamma.reshape(1, K_pad).astype(jnp.float32),
                     beta.reshape(1, K_pad).astype(jnp.float32)]
    if trans_b:
        in_specs.append(pl.BlockSpec((tn_e, tk_e), lambda i, j, k: (j, k)))
    else:
        in_specs.append(pl.BlockSpec((tk_e, tn_e), lambda i, j, k: (k, j)))
    operands.append(w)
    if has_bias:
        in_specs.append(pl.BlockSpec((1, tn_e), lambda i, j, k: (0, j)))
        operands.append(b.reshape(1, N_pad).astype(jnp.float32))
    if has_res:
        in_specs.append(pl.BlockSpec((tm_e, tn_e), lambda i, j, k: (i, j)))
        operands.append(residual)

    out = pl.pallas_call(
        kernel,
        out_shape=jax.ShapeDtypeStruct((M_pad, N_pad), out_dtype),
        grid=(M_pad // tm_e, N_pad // tn_e, nk),
        in_specs=in_specs,
        out_specs=pl.BlockSpec((tm_e, tn_e), lambda i, j, k: (i, j)),
        scratch_shapes=[pltpu.VMEM((tm_e, tn_e), jnp.float32)],
        compiler_params=pltpu.CompilerParams(
            dimension_semantics=("parallel", "parallel", "arbitrary")),
    )(*operands)

    if M_pad != M or N_pad != N:
        out = out[:M, :N]
    return out


# ---------------------------- attention kernel ----------------------------
# Grid over (B, H); per-head K/V block keeps VMEM bounded and gives the
# megacore a parallel axis. Scores scaled once by dh**-0.5; softmax
# denominator via pl.reciprocal (EUP slot).

def _make_mha_kernel(*, scale, has_mask):
    def kernel(*refs):
        if has_mask:
            q_ref, k_ref, v_ref, m_ref, o_ref = refs
        else:
            q_ref, k_ref, v_ref, o_ref = refs
        q = q_ref[0, 0]                       # (T, Dh)
        k = k_ref[0, 0]                       # (S, Dh)
        v = v_ref[0, 0]                       # (S, Dh)
        s = lax.dot_general(q, k, (((1,), (1,)), ((), ())),
                            preferred_element_type=jnp.float32) * scale
        if has_mask:
            s = s + m_ref[...]
        m = jnp.max(s, axis=-1, keepdims=True)
        e = jnp.exp(s - m)
        denom = jnp.sum(e, axis=-1, keepdims=True)
        p = e * pl.reciprocal(denom, approx=True)
        o_ref[0, 0] = jnp.dot(p.astype(v.dtype), v,
                              preferred_element_type=jnp.float32
                              ).astype(o_ref.dtype)
    return kernel


def pallas_mha(q, k, v, mask=None, out_dtype=jnp.bfloat16):
    """q: (B, H, T, Dh); k, v: (B, H, S, Dh); mask: (T, S) additive or None."""
    B, H, T, Dh = q.shape
    S = k.shape[2]
    has_mask = mask is not None
    kernel = _make_mha_kernel(scale=float(Dh) ** -0.5, has_mask=has_mask)
    in_specs = [
        pl.BlockSpec((1, 1, T, Dh), lambda b, h: (b, h, 0, 0)),
        pl.BlockSpec((1, 1, S, Dh), lambda b, h: (b, h, 0, 0)),
        pl.BlockSpec((1, 1, S, Dh), lambda b, h: (b, h, 0, 0)),
    ]
    operands = [q, k, v]
    if has_mask:
        in_specs.append(pl.BlockSpec((T, S), lambda b, h: (0, 0)))
        operands.append(mask)
    return pl.pallas_call(
        kernel,
        out_shape=jax.ShapeDtypeStruct((B, H, T, Dh), out_dtype),
        grid=(B, H),
        in_specs=in_specs,
        out_specs=pl.BlockSpec((1, 1, T, Dh), lambda b, h: (b, h, 0, 0)),
        compiler_params=pltpu.CompilerParams(
            dimension_semantics=("parallel", "parallel")),
    )(*operands)


# ---------------------------- glue helpers ----------------------------

def split_heads(x, n_head):
    B, T, D = x.shape
    return x.reshape(B, T, n_head, D // n_head).transpose(0, 2, 1, 3)


def merge_heads(x):
    B, H, T, Dh = x.shape
    return x.transpose(0, 2, 1, 3).reshape(B, T, H * Dh)


def init_raw_params(key, n_vocab, n_ctx, n_state, n_layer, n_mlp):
    # Deterministic synthetic f32 weights (the OpenVINO checkpoint is not loaded).
    keys = jax.random.split(key, 2 + n_layer)

    def w(k, shape, scale=0.02):
        return scale * jax.random.normal(k, shape, jnp.float32)

    ones = lambda n: jnp.ones((n,), jnp.float32)
    zeros = lambda n: jnp.zeros((n,), jnp.float32)

    params = {
        "tok_emb": w(keys[0], (n_vocab, n_state)),
        "pos_emb": w(keys[1], (n_ctx, n_state)),
        "ln_g": ones(n_state), "ln_b": zeros(n_state),
        "blocks": [],
    }
    for l in range(n_layer):
        bk = jax.random.split(keys[2 + l], 10)
        params["blocks"].append({
            "attn_ln_g": ones(n_state), "attn_ln_b": zeros(n_state),
            "attn_q_w": w(bk[0], (n_state, n_state)), "attn_q_b": zeros(n_state),
            "attn_k_w": w(bk[1], (n_state, n_state)),                   # no bias
            "attn_v_w": w(bk[2], (n_state, n_state)), "attn_v_b": zeros(n_state),
            "attn_o_w": w(bk[3], (n_state, n_state)), "attn_o_b": zeros(n_state),
            "cross_ln_g": ones(n_state), "cross_ln_b": zeros(n_state),
            "cross_q_w": w(bk[4], (n_state, n_state)), "cross_q_b": zeros(n_state),
            "cross_k_w": w(bk[5], (n_state, n_state)),                  # no bias
            "cross_v_w": w(bk[6], (n_state, n_state)), "cross_v_b": zeros(n_state),
            "cross_o_w": w(bk[7], (n_state, n_state)), "cross_o_b": zeros(n_state),
            "mlp_ln_g": ones(n_state), "mlp_ln_b": zeros(n_state),
            "mlp1_w": w(bk[8], (n_state, n_mlp)), "mlp1_b": zeros(n_mlp),
            "mlp2_w": w(bk[9], (n_mlp, n_state)), "mlp2_b": zeros(n_state),
        })
    return params


def prepare_params(raw):
    """Inference params: bf16 weights, fused QKV weight/bias, f32 LN/bias."""
    f32, bf16 = jnp.float32, jnp.bfloat16
    n_state = raw["tok_emb"].shape[1]
    zeros = jnp.zeros((n_state,), f32)
    out = {
        "tok_emb": raw["tok_emb"].astype(bf16),
        "pos_emb": raw["pos_emb"].astype(f32),
        "ln_g": raw["ln_g"].astype(f32), "ln_b": raw["ln_b"].astype(f32),
        "blocks": [],
    }
    for p in raw["blocks"]:
        out["blocks"].append({
            "attn_ln_g": p["attn_ln_g"].astype(f32),
            "attn_ln_b": p["attn_ln_b"].astype(f32),
            "qkv_w": jnp.concatenate(
                [p["attn_q_w"], p["attn_k_w"], p["attn_v_w"]], axis=1).astype(bf16),
            "qkv_b": jnp.concatenate(
                [p["attn_q_b"], zeros, p["attn_v_b"]]).astype(f32),
            "attn_o_w": p["attn_o_w"].astype(bf16),
            "attn_o_b": p["attn_o_b"].astype(f32),
            "cross_ln_g": p["cross_ln_g"].astype(f32),
            "cross_ln_b": p["cross_ln_b"].astype(f32),
            "cross_q_w": p["cross_q_w"].astype(bf16),
            "cross_q_b": p["cross_q_b"].astype(f32),
            "cross_k_w": p["cross_k_w"].astype(bf16),
            "cross_v_w": p["cross_v_w"].astype(bf16),
            "cross_v_b": p["cross_v_b"].astype(f32),
            "cross_o_w": p["cross_o_w"].astype(bf16),
            "cross_o_b": p["cross_o_b"].astype(f32),
            "mlp_ln_g": p["mlp_ln_g"].astype(f32),
            "mlp_ln_b": p["mlp_ln_b"].astype(f32),
            "mlp1_w": p["mlp1_w"].astype(bf16), "mlp1_b": p["mlp1_b"].astype(f32),
            "mlp2_w": p["mlp2_w"].astype(bf16), "mlp2_b": p["mlp2_b"].astype(f32),
        })
    return out


def precompute_cross_kv(params, xa, n_head):
    """Cross-attention K/V from audio features; xa is fixed during decoding,
    so callers can compute this once per utterance and reuse every step."""
    B, Sa, n_state = xa.shape
    xa2 = xa.reshape(B * Sa, n_state)
    out = []
    for p in params["blocks"]:
        kx = pallas_linear(xa2, p["cross_k_w"], None, out_dtype=jnp.bfloat16)
        vx = pallas_linear(xa2, p["cross_v_w"], p["cross_v_b"],
                           out_dtype=jnp.bfloat16)
        out.append((split_heads(kx.reshape(B, Sa, n_state), n_head),
                    split_heads(vx.reshape(B, Sa, n_state), n_head)))
    return out


# ---------------------------- decoder forward ----------------------------

@functools.partial(jax.jit, static_argnames=("offset", "n_head"),
                   donate_argnames=("kv_cache",))
def _decoder_forward(params, tokens, kv_cache, cross_kv, *, offset, n_head):
    B, T = tokens.shape
    n_ctx, n_state = kv_cache.shape[3], kv_cache.shape[4]
    assert offset + T <= n_ctx, "kv_cache overflow: offset + T > n_ctx"
    cache_dtype = kv_cache.dtype

    # token + positional embedding (static offset -> plain slice)
    x = params["tok_emb"][tokens].astype(jnp.float32)
    x = x + params["pos_emb"][offset:offset + T][None, :, :]

    # self-attention attends only over the live prefix of the cache
    S_live = min(_round_up(offset + T, 8), n_ctx)
    q_pos = offset + jnp.arange(T)[:, None]
    k_pos = jnp.arange(S_live)[None, :]
    causal_mask = jnp.where(k_pos <= q_pos, 0.0, -1e30).astype(jnp.float32)

    new_cache = kv_cache
    for l, p in enumerate(params["blocks"]):
        x2 = x.reshape(B * T, n_state)

        # ---- fused LayerNorm + QKV projection (single bf16 matmul) ----
        qkv = pallas_linear(x2, p["qkv_w"], p["qkv_b"],
                            gamma=p["attn_ln_g"], beta=p["attn_ln_b"],
                            out_dtype=jnp.bfloat16)
        q = qkv[:, :n_state].reshape(B, T, n_state)
        knew = qkv[:, n_state:2 * n_state].reshape(B, T, n_state)
        vnew = qkv[:, 2 * n_state:].reshape(B, T, n_state)

        # in-place cache update (kv_cache is donated to this jitted fn)
        new_cache = new_cache.at[l, 0, :, offset:offset + T, :].set(
            knew.astype(cache_dtype))
        new_cache = new_cache.at[l, 1, :, offset:offset + T, :].set(
            vnew.astype(cache_dtype))
        k_live = new_cache[l, 0, :, :S_live, :].astype(jnp.bfloat16)
        v_live = new_cache[l, 1, :, :S_live, :].astype(jnp.bfloat16)

        o = pallas_mha(split_heads(q, n_head), split_heads(k_live, n_head),
                       split_heads(v_live, n_head), causal_mask)
        x2 = pallas_linear(merge_heads(o).reshape(B * T, n_state),
                           p["attn_o_w"], p["attn_o_b"],
                           residual=x2, out_dtype=jnp.float32)

        # ---- cross-attention (K/V precomputed from audio features) ----
        qx = pallas_linear(x2, p["cross_q_w"], p["cross_q_b"],
                           gamma=p["cross_ln_g"], beta=p["cross_ln_b"],
                           out_dtype=jnp.bfloat16).reshape(B, T, n_state)
        kx, vx = cross_kv[l]
        o = pallas_mha(split_heads(qx, n_head), kx, vx)   # no mask needed
        x2 = pallas_linear(merge_heads(o).reshape(B * T, n_state),
                           p["cross_o_w"], p["cross_o_b"],
                           residual=x2, out_dtype=jnp.float32)

        # ---- MLP: fused LN + Linear + GELU, then Linear + residual ----
        h = pallas_linear(x2, p["mlp1_w"], p["mlp1_b"],
                          gamma=p["mlp_ln_g"], beta=p["mlp_ln_b"],
                          act="gelu", out_dtype=jnp.bfloat16)
        x2 = pallas_linear(h, p["mlp2_w"], p["mlp2_b"],
                           residual=x2, out_dtype=jnp.float32)
        x = x2.reshape(B, T, n_state)

    # final LN fused into the tied-embedding logits projection
    # (trans_b: contract against tok_emb directly -> no transposed HBM copy,
    #  no zero bias; vocab is tiled over the N grid axis at real sizes)
    logits = pallas_linear(x.reshape(B * T, n_state), params["tok_emb"], None,
                           gamma=params["ln_g"], beta=params["ln_b"],
                           trans_b=True, out_dtype=jnp.float32)
    n_vocab = params["tok_emb"].shape[0]
    return logits.reshape(B, T, n_vocab), new_cache


def openvino_text_decoder_forward(params, tokens, xa, kv_cache, offset, n_head,
                                  cross_kv=None):
    """Equivalent of OpenVinoTextDecoder.forward -> (logits, new kv_cache)."""
    if cross_kv is None:
        # TODO(synk): the OpenVINO graph recomputes cross K/V every call; here
        # callers should precompute once per utterance and pass it in.
        cross_kv = precompute_cross_kv(params, xa, n_head)
    return _decoder_forward(params, tokens, kv_cache, cross_kv,
                            offset=int(offset), n_head=int(n_head))


# ---------------------------- demo ----------------------------

if __name__ == "__main__":
    # TODO(synk): OpenVINO runtime graph load (Core/read_model/compile_model)
    # has no Pallas equivalent; weights are synthetic/deterministic.
    n_vocab, n_ctx, n_state, n_head, n_layer = 64, 16, 32, 4, 2
    n_mlp = 4 * n_state
    B, T, Sa, offset = 2, 8, 16, 4

    key = jax.random.PRNGKey(0)
    kp, kt, ka, kc = jax.random.split(key, 4)

    raw = init_raw_params(kp, n_vocab, n_ctx, n_state, n_layer, n_mlp)
    params = prepare_params(raw)

    tokens = jax.random.randint(kt, (B, T), 0, n_vocab, dtype=jnp.int32)
    xa = jax.random.normal(ka, (B, Sa, n_state), jnp.float32)

    kv_cache = jnp.zeros((n_layer, 2, B, n_ctx, n_state), jnp.float32)
    prev = 0.02 * jax.random.normal(kc, (n_layer, 2, B, offset, n_state),
                                    jnp.float32)
    kv_cache = kv_cache.at[:, :, :, :offset, :].set(prev)   # previously cached K/V

    cross_kv = precompute_cross_kv(params, xa, n_head)       # once per utterance
    logits, new_cache = openvino_text_decoder_forward(
        params, tokens, xa, kv_cache, offset, n_head, cross_kv=cross_kv)
    jax.block_until_ready((logits, new_cache))

    assert logits.shape == (B, T, n_vocab) and logits.dtype == jnp.float32
    assert new_cache.shape == (n_layer, 2, B, n_ctx, n_state)
    assert bool(jnp.all(jnp.isfinite(logits)))
    print("KERNEL_OK")
</pallas_src>

<mosaic_0001>
module attributes {stable_mosaic.version = 11 : i64} {
  func.func @kernel(%arg0: i32, %arg1: i32, %arg2: i32, %arg3: memref<32x32xf32, #tpu.memory_space<vmem>>, %arg4: memref<32x32xbf16, #tpu.memory_space<vmem>>, %arg5: memref<32x32xbf16, #tpu.memory_space<vmem>>, %arg6: memref<32x32xf32, #tpu.memory_space<vmem>>) attributes {dimension_semantics = [#tpu.dimension_semantics<parallel>, #tpu.dimension_semantics<parallel>, #tpu.dimension_semantics<arbitrary>], iteration_bounds = array<i64: 1, 1, 1>, scalar_prefetch = 0 : i64, scratch_operands = 1 : i64, tpu.core_type = #tpu.core_type<tc>, window_params = [{transform_indices = @transform_0, window_bounds = array<i64: 32, 32>}, {transform_indices = @transform_1, window_bounds = array<i64: 32, 32>}, {transform_indices = @transform_2, window_bounds = array<i64: 32, 32>}]} {
    %c0_i32 = arith.constant 0 : i32
    %0 = arith.cmpi eq, %arg2, %c0_i32 : i32
    %1 = arith.extui %0 : i1 to i32
    %c0_i32_0 = arith.constant 0 : i32
    %2 = arith.cmpi ne, %1, %c0_i32_0 : i32
    scf.if %2 {
      %cst_10 = arith.constant 0.000000e+00 : f32
      %13 = vector.broadcast %cst_10 : f32 to vector<32x32xf32>
      %c0_11 = arith.constant 0 : index
      %c0_12 = arith.constant 0 : index
      %14 = vector.load %arg6[%c0_11, %c0_12] : memref<32x32xf32, #tpu.memory_space<vmem>>, vector<32x32xf32>
      tpu.vector_store %arg6[%c0_11, %c0_12], %13 {strides = array<i32>} : memref<32x32xf32, #tpu.memory_space<vmem>>, vector<32x32xf32>,
    } else {
    }
    %c0 = arith.constant 0 : index
    %c0_1 = arith.constant 0 : index
    %3 = vector.load %arg3[%c0, %c0_1] : memref<32x32xf32, #tpu.memory_space<vmem>>, vector<32x32xf32>
    %4 = arith.truncf %3 : vector<32x32xf32> to vector<32x32xbf16>
    %c0_2 = arith.constant 0 : index
    %c0_3 = arith.constant 0 : index
    %5 = vector.load %arg4[%c0_2, %c0_3] : memref<32x32xbf16, #tpu.memory_space<vmem>>, vector<32x32xbf16>
    %c0_4 = arith.constant 0 : index
    %c0_5 = arith.constant 0 : index
    %6 = vector.load %arg6[%c0_4, %c0_5] : memref<32x32xf32, #tpu.memory_space<vmem>>, vector<32x32xf32>
    %cst = arith.constant dense<0.000000e+00> : vector<32x32xf32>
    %7 = tpu.matmul %4, %5, %cst {dimension_numbers = #tpu.dot_dimension_numbers<[1], [0], [0], [1], [0, 0, 1, 1], [], []>} : vector<32x32xbf16>, vector<32x32xbf16>, vector<32x32xf32> -> vector<32x32xf32>
    %8 = arith.addf %6, %7 : vector<32x32xf32>
    %c0_6 = arith.constant 0 : index
    %c0_7 = arith.constant 0 : index
    %9 = vector.load %arg6[%c0_6, %c0_7] : memref<32x32xf32, #tpu.memory_space<vmem>>, vector<32x32xf32>
    tpu.vector_store %arg6[%c0_6, %c0_7], %8 {strides = array<i32>} : memref<32x32xf32, #tpu.memory_space<vmem>>, vector<32x32xf32>,
    %c0_i32_8 = arith.constant 0 : i32
    %10 = arith.cmpi eq, %arg2, %c0_i32_8 : i32
    %11 = arith.extui %10 : i1 to i32
    %c0_i32_9 = arith.constant 0 : i32
    %12 = arith.cmpi ne, %11, %c0_i32_9 : i32
    scf.if %12 {
      %c0_10 = arith.constant 0 : index
      %c0_11 = arith.constant 0 : index
      %13 = vector.load %arg6[%c0_10, %c0_11] : memref<32x32xf32, #tpu.memory_space<vmem>>, vector<32x32xf32>
      %14 = arith.truncf %13 : vector<32x32xf32> to vector<32x32xbf16>
      %c0_12 = arith.constant 0 : index
      %c0_13 = arith.constant 0 : index
      %15 = vector.load %arg5[%c0_12, %c0_13] : memref<32x32xbf16, #tpu.memory_space<vmem>>, vector<32x32xbf16>
      tpu.vector_store %arg5[%c0_12, %c0_13], %14 {strides = array<i32>} : memref<32x32xbf16, #tpu.memory_space<vmem>>, vector<32x32xbf16>,
    } else {
    }
    return
  }
  func.func @transform_0(%arg0: i32, %arg1: i32, %arg2: i32) -> (i32, i32) {
    %c0_i32 = arith.constant 0 : i32
    return %arg0, %arg2 : i32, i32
  }
  func.func @transform_1(%arg0: i32, %arg1: i32, %arg2: i32) -> (i32, i32) {
    %c0_i32 = arith.constant 0 : i32
    return %arg2, %arg1 : i32, i32
  }
  func.func @transform_2(%arg0: i32, %arg1: i32, %arg2: i32) -> (i32, i32) {
    %c0_i32 = arith.constant 0 : i32
    return %arg0, %arg1 : i32, i32
  }
}

</mosaic_0001>

<llo_original>
// kernel: tpu_custom_call.1
$region0: #{tpu_custom_call.1}
  #allocation0 [shape = 'u32[]', space=smem, size = 0x4, offset = 0x4, fixed_abs, tag = 'smem constant byte address 0x4 - core index']
  #allocation1 [shape = 'u32[72,128]{1,0:T(1,128)}', space=vmem, size = 0x9000, scoped, tag = 'internal scratch']
  #allocation2 [shape = 'f32[32,32]{1,0:T(8,128)}', space=vmem, size = 0x4000, scoped, tag = 'scratch operand']
  %s0 = inlined_call_operand.hbm [shape: f32[32,32], index: 0, kind: input, shape index: {}]
  %s1 = inlined_call_operand.hbm [shape: bf16[32,32], index: 1, kind: input, shape index: {}]
  %s2 = inlined_call_operand.hbm [shape: bf16[32,32], index: 2, kind: output, shape index: {}]
  %s3 = sld [smem:[#allocation0]]
  $region34: #{tpu_custom_call.1} parent=0
    _
  %s5 = ssub.s32 1, %s3
  %s6 = scalar_select 0, %s5, %s3
  $region1: #{tpu_custom_call.1} parent=0
    #allocation3 [shape = 'u8[16384]{0}', space=vmem, size = 0x4000, scoped, tag = 'input window, operand 0, single buffered']
    #allocation4 [shape = 's32[1]{0}', space=sflag, size = 0x4, scoped, tag = 'scoped memory for tpu_custom_call.1']
    #allocation5 [shape = 's32[1]{0}', space=sflag, size = 0x4, scoped, tag = 'scoped memory for tpu_custom_call.1']
    #allocation6 [shape = 'u8[8192]{0}', space=vmem, size = 0x2000, scoped, tag = 'input window, operand 1, single buffered']
    #allocation7 [shape = 's32[1]{0}', space=sflag, size = 0x4, scoped, tag = 'scoped memory for tpu_custom_call.1']
    #allocation8 [shape = 'u8[8192]{0}', space=vmem, size = 0x2000, scoped, tag = 'output window, operand 0, single buffered']
    %7 = vsyncpa [#allocation4], 0
    %8 = vsyncpa [#allocation7], 0
    %9 = vsyncpa [#allocation5], 0
    // Predicated region
    $region2: #{tpu_custom_call.1} parent=1 // pred_check
      _
    $region3: #{tpu_custom_call.1} parent=1 // pred_check_branch
      %11 = sbr.rel (0) target = $region5
    $region4: #{tpu_custom_call.1} parent=1 // pred_region
      %13 = vsyncadd [#allocation4], 0
      %s14 = sshll.u32 %s0, 4
      %s15 = int_to_ptr.hbm [resolvable:$true] %s14
      %s16 = sshll.u32 [#allocation3], 4
      %s17 = int_to_ptr.vmem [resolvable:$true] %s16
      %22 = dma.hbm_to_vmem [thread:$0]  %s15, 512, %s17, [#allocation4], 128, 128, 8
    $region5: #{tpu_custom_call.1} parent=1 // pred_fallthru
      _
    // Predicated region
    $region6: #{tpu_custom_call.1} parent=1 // pred_check
      _
    $region7: #{tpu_custom_call.1} parent=1 // pred_check_branch
      %24 = sbr.rel (0) target = $region9
    $region8: #{tpu_custom_call.1} parent=1 // pred_region
      %26 = vsyncadd [#allocation7], 0
      %s27 = sshll.u32 %s1, 4
      %s28 = int_to_ptr.hbm [resolvable:$true] %s27
      %s29 = sshll.u32 [#allocation6], 4
      %s30 = int_to_ptr.vmem [resolvable:$true] %s29
      %35 = dma.hbm_to_vmem [thread:$0]  %s28, 256, %s30, [#allocation7], 64, 64, 4
    $region9: #{tpu_custom_call.1} parent=1 // pred_fallthru
      _
    // Predicated region
    $region10: #{tpu_custom_call.1} parent=1 // pred_check
      _
    $region11: #{tpu_custom_call.1} parent=1 // pred_check_branch
      %37 = sbr.rel (0) target = $region13
    $region12: #{tpu_custom_call.1} parent=1 // pred_region
      %39 = dma.done [#allocation4], 512
    $region13: #{tpu_custom_call.1} parent=1 // pred_fallthru
      _
    // Predicated region
    $region14: #{tpu_custom_call.1} parent=1 // pred_check
      _
    $region15: #{tpu_custom_call.1} parent=1 // pred_check_branch
      %41 = sbr.rel (0) target = $region17
    $region16: #{tpu_custom_call.1} parent=1 // pred_region
      %43 = dma.done [#allocation7], 256
    $region17: #{tpu_custom_call.1} parent=1 // pred_fallthru
      _
    %p45 = scmp.eq.s32.totalorder 0, 0
    // Predicated region
    $region18: #{tpu_custom_call.1} parent=1 // pred_check
      %p46 = pneg %p45
    $region19: #{tpu_custom_call.1} parent=1 // pred_check_branch
      %48 = sbr.rel (%p46) target = $region21
    $region20: #{tpu_custom_call.1} parent=1 // pred_region
      %vm49 = vcmask 261120
      %50 = vst.msk [vmem:[#allocation2] sm:$0xff] %vm49, 0.0
      %51 = vst.msk [vmem:[#allocation2 + $0x8] sm:$0xff] %vm49, 0.0
      %52 = vst.msk [vmem:[#allocation2 + $0x10] sm:$0xff] %vm49, 0.0
      %53 = vst.msk [vmem:[#allocation2 + $0x18] sm:$0xff] %vm49, 0.0
    $region21: #{tpu_custom_call.1} parent=1 // pred_fallthru
      _
    %v54 = vld [vmem:[#allocation3] sm:$0xff]
    %v55 = vld [vmem:[#allocation3 + $0x8] sm:$0xff]
    %v56 = vld [vmem:[#allocation3 + $0x10] sm:$0xff]
    %v57 = vld [vmem:[#allocation3 + $0x18] sm:$0xff]
    %v58 = vpack.c.bf16 %v55, %v54
    %v59 = vpack.c.bf16 %v57, %v56
    %v60 = vld [vmem:[#allocation6] sm:$0xf]
    %v61 = vld [vmem:[#allocation6 + $0x4] sm:$0xf]
    %v62 = vld [vmem:[#allocation6 + $0x8] sm:$0xf]
    %v63 = vld [vmem:[#allocation6 + $0xc] sm:$0xf]
    %v64 = vld [vmem:[#allocation2] sm:$0xff]
    %v65 = vld [vmem:[#allocation2 + $0x8] sm:$0xff]
    %v66 = vld [vmem:[#allocation2 + $0x10] sm:$0xff]
    %v67 = vld [vmem:[#allocation2 + $0x18] sm:$0xff]
    %v72 = vunpack.c.l.b16 %v60
    %v73 = vunpack.c.l.b16 %v61
    %v74 = vunpack.c.l.b16 %v62
    %v75 = vunpack.c.l.b16 %v63
    %v76 = vpack.c.b16 %v73, %v72
    %v77 = vpack.c.b16 %v75, %v74
    %vm80 = vcmask 261120
    %v82 = vsel %vm80, %v58, 0
    %v85 = vsel %vm80, %v59, 0
    %87 = vmatpush.bf16.msra.mxu0 0
    %88 = vmatpush.bf16.msra.mxu0 0
    %89 = vmatpush.bf16.msra.mxu0 0
    %90 = vmatpush.bf16.msra.mxu0 0
    %91 = vmatpush.bf16.msra.mxu0 0
    %92 = vmatpush.bf16.msra.mxu0 0
    %93 = vmatpush.bf16.msra.mxu0 %v77
    %94 = vmatpush.bf16.msra.mxu0 %v76
    %95 = vmatmul.bf16.gmra.mxu0 %v82
    %v96 = vpop.f32.mrf.mxu0
    %v97 = vadd.f32 0.0, %v96
    %v98 = vpop.f32.mrf.mxu0
    %v99 = vadd.f32 0.0, %v98
    %100 = vmatmul.bf16.gmra.mxu0 %v85
    %v101 = vpop.f32.mrf.mxu0
    %v102 = vadd.f32 0.0, %v101
    %v103 = vpop.f32.mrf.mxu0
    %v104 = vadd.f32 0.0, %v103
    %105 = vdwg.mxu0
    %v106 = vadd.f32 %v64, %v97
    %v107 = vadd.f32 %v65, %v99
    %v108 = vadd.f32 %v66, %v102
    %v109 = vadd.f32 %v67, %v104
    %110 = vst.msk [vmem:[#allocation2] sm:$0xff] %vm80, %v106
    %111 = vst.msk [vmem:[#allocation2 + $0x8] sm:$0xff] %vm80, %v107
    %112 = vst.msk [vmem:[#allocation2 + $0x10] sm:$0xff] %vm80, %v108
    %113 = vst.msk [vmem:[#allocation2 + $0x18] sm:$0xff] %vm80, %v109
    // Predicated region
    $region22: #{tpu_custom_call.1} parent=1 // pred_check
      %p114 = pneg %p45
    $region23: #{tpu_custom_call.1} parent=1 // pred_check_branch
      %116 = sbr.rel (%p114) target = $region25
    $region24: #{tpu_custom_call.1} parent=1 // pred_region
      %v117 = vld [vmem:[#allocation2] sm:$0xff]
      %v118 = vld [vmem:[#allocation2 + $0x8] sm:$0xff]
      %v119 = vld [vmem:[#allocation2 + $0x10] sm:$0xff]
      %v120 = vld [vmem:[#allocation2 + $0x18] sm:$0xff]
      %v121 = vpack.c.bf16 %v117, %v117
      %v122 = vpack.c.bf16 %v118, %v118
      %v123 = vpack.c.bf16 %v119, %v119
      %v124 = vpack.c.bf16 %v120, %v120
      %vm125 = vcmask 257024
      %126 = vst.msk [vmem:[#allocation8] sm:$0xf] %vm125, %v121
      %127 = vst.msk [vmem:[#allocation8 + $0x4] sm:$0xf] %vm125, %v122
      %128 = vst.msk [vmem:[#allocation8 + $0x8] sm:$0xf] %vm125, %v123
      %129 = vst.msk [vmem:[#allocation8 + $0xc] sm:$0xf] %vm125, %v124
    $region25: #{tpu_custom_call.1} parent=1 // pred_fallthru
      _
    // Predicated region
    $region26: #{tpu_custom_call.1} parent=1 // pred_check
      _
    $region27: #{tpu_custom_call.1} parent=1 // pred_check_branch
      %131 = sbr.rel (0) target = $region29
    $region28: #{tpu_custom_call.1} parent=1 // pred_region
      %133 = vsyncadd [#allocation5], 0
      %s134 = sshll.u32 [#allocation8], 4
      %s135 = int_to_ptr.vmem [resolvable:$true] %s134
      %s136 = sshll.u32 %s2, 4
      %s137 = int_to_ptr.hbm [resolvable:$true] %s136
      %142 = dma.vmem_to_hbm [thread:$0]  %s135, 256, %s137, [#allocation5], 64, 64, 4
    $region29: #{tpu_custom_call.1} parent=1 // pred_fallthru
      _
    // Predicated region
    $region30: #{tpu_custom_call.1} parent=1 // pred_check
      _
    $region31: #{tpu_custom_call.1} parent=1 // pred_check_branch
      %144 = sbr.rel (0) target = $region33
    $region32: #{tpu_custom_call.1} parent=1 // pred_region
      %146 = dma.done [#allocation5], 256
    $region33: #{tpu_custom_call.1} parent=1 // pred_fallthru
      _
    %147 = vsyncpa [#allocation4], 1
    %148 = vsyncpa [#allocation7], 1
    %149 = vsyncpa [#allocation5], 1

</llo_original>
